<compile_context>
chip_gen: v7x
topology: tpu7x:2x2x1
jax: 0.10.0
libtpu: 0.0.40
codegen_flags: <defaults>
</compile_context>

<pallas_src>
import functools

import jax
import jax.numpy as jnp
from jax.experimental import pallas as pl
from jax.experimental.pallas import tpu as pltpu


def _bn_kernel(x_ref, gamma_ref, beta_ref, o_ref, *, eps, inv_r):
    # x_ref / o_ref : (TC, R)  -- channels on sublanes, spatial (N*H*W) on lanes.
    # gamma_ref / beta_ref : (TC, 1) -- broadcast along lanes.
    x = x_ref[...].astype(jnp.float32)

    # Per-channel batch mean: single lane (XLU) reduction.
    mean = jnp.sum(x, axis=1, keepdims=True) * jnp.float32(inv_r)     # (TC, 1)

    # Two-pass centered biased variance; `x` is dead after this subtraction.
    centered = x - mean                                               # (TC, R)
    var = jnp.sum(centered * centered, axis=1, keepdims=True) * jnp.float32(inv_r)

    # Fold the affine: out = centered * (gamma * rsqrt(var + eps)) + beta
    scale = gamma_ref[...].astype(jnp.float32) * jax.lax.rsqrt(
        var + jnp.float32(eps)
    )                                                                 # (TC, 1)
    shift = beta_ref[...].astype(jnp.float32)                         # (TC, 1)

    o_ref[...] = (centered * scale + shift).astype(o_ref.dtype)


_VMEM_LIMIT_BYTES = 32 * 1024 * 1024     # safe on v5e/v6e/v7x (<= physical everywhere)
_VMEM_BUDGET_BYTES = 24 * 1024 * 1024    # headroom for param tiles / scratch


def _pick_channel_block(c, r, itemsize):
    """Channel tile size: whole C in one step if it fits VMEM, else the largest
    sublane-aligned divisor of C whose double-buffered in+out block fits."""
    per_chan_bytes = 4 * r * itemsize  # in + out, each double-buffered
    if c * per_chan_bytes <= _VMEM_BUDGET_BYTES:
        return c  # grid=(1,): one step, params DMA'd once, no re-fetch
    # Sublane packing: 8 rows for 32-bit, 16 for bf16/f16, 32 for int8.
    pack = max(8, 32 // max(itemsize, 1))
    best = pack
    for tc in range(pack, c, pack):
        if c % tc == 0 and tc * per_chan_bytes <= _VMEM_BUDGET_BYTES:
            best = tc
    return best


def batchnorm2d_pallas(x_nchw, gamma, beta, *, eps=1e-3):
    """Training-mode BatchNorm2d forward. x_nchw: (N, C, H, W)."""
    n, c, h, w = x_nchw.shape
    r = n * h * w

    # Channel-major 2-D view: free contiguous reshape for N == 1 (this module).
    if n == 1:
        x2 = x_nchw.reshape(c, r)
    else:
        x2 = jnp.moveaxis(x_nchw, 1, 0).reshape(c, r)
    g2 = gamma.reshape(c, 1)
    b2 = beta.reshape(c, 1)

    tc = _pick_channel_block(c, r, x_nchw.dtype.itemsize)
    grid = (pl.cdiv(c, tc),)
    inv_r = 1.0 / float(r)

    kernel = functools.partial(_bn_kernel, eps=float(eps), inv_r=inv_r)

    out2 = pl.pallas_call(
        kernel,
        out_shape=jax.ShapeDtypeStruct((c, r), x_nchw.dtype),
        grid=grid,
        in_specs=[
            pl.BlockSpec((tc, r), lambda i: (i, 0)),
            pl.BlockSpec((tc, 1), lambda i: (i, 0)),
            pl.BlockSpec((tc, 1), lambda i: (i, 0)),
        ],
        out_specs=pl.BlockSpec((tc, r), lambda i: (i, 0)),
        compiler_params=pltpu.CompilerParams(
            dimension_semantics=("parallel",),
            vmem_limit_bytes=_VMEM_LIMIT_BYTES,
        ),
    )(x2, g2, b2)

    if n == 1:
        return out2.reshape(n, c, h, w)
    return jnp.moveaxis(out2.reshape(c, n, h, w), 0, 1)


if __name__ == "__main__":
    key = jax.random.PRNGKey(0)
    kx, kg, kb = jax.random.split(key, 3)

    # Shapes consistent with the module: BatchNorm2d(176) on (1, 176, 14, 14).
    N, C, H, W = 1, 176, 14, 14
    x = jax.random.normal(kx, (N, C, H, W), dtype=jnp.float32)
    # Non-trivial affine parameters to exercise the scale/shift path
    # (PyTorch default init would be gamma=1, beta=0).
    gamma = 1.0 + 0.1 * jax.random.normal(kg, (C,), dtype=jnp.float32)
    beta = 0.1 * jax.random.normal(kb, (C,), dtype=jnp.float32)

    out = batchnorm2d_pallas(x, gamma, beta, eps=1e-3)
    out = jax.block_until_ready(out)

    # Reference: plain-JAX training-mode batch norm (biased variance).
    mean = jnp.mean(x, axis=(0, 2, 3), keepdims=True)
    var = jnp.mean((x - mean) ** 2, axis=(0, 2, 3), keepdims=True)
    ref = (x - mean) / jnp.sqrt(var + 1e-3) * gamma.reshape(1, C, 1, 1) + beta.reshape(
        1, C, 1, 1
    )
    assert out.shape == (N, C, H, W)
    assert jnp.max(jnp.abs(out - ref)) < 1e-4, "mismatch vs reference"

    print("KERNEL_OK")
</pallas_src>

<mosaic_0001>
module attributes {stable_mosaic.version = 11 : i64} {
  func.func @_bn_kernel(%arg0: i32, %arg1: memref<176x196xf32, #tpu.memory_space<vmem>>, %arg2: memref<176x1xf32, #tpu.memory_space<vmem>>, %arg3: memref<176x1xf32, #tpu.memory_space<vmem>>, %arg4: memref<176x196xf32, #tpu.memory_space<vmem>>) attributes {dimension_semantics = [#tpu.dimension_semantics<parallel>], iteration_bounds = array<i64: 1>, scalar_prefetch = 0 : i64, scratch_operands = 0 : i64, tpu.core_type = #tpu.core_type<tc>, window_params = [{transform_indices = @transform_0, window_bounds = array<i64: 176, 196>}, {transform_indices = @transform_1, window_bounds = array<i64: 176, 1>}, {transform_indices = @transform_2, window_bounds = array<i64: 176, 1>}, {transform_indices = @transform_3, window_bounds = array<i64: 176, 196>}]} {
    %c0 = arith.constant 0 : index
    %c0_0 = arith.constant 0 : index
    %0 = vector.load %arg1[%c0, %c0_0] : memref<176x196xf32, #tpu.memory_space<vmem>>, vector<176x196xf32>
    %cst = arith.constant dense<0.000000e+00> : vector<176xf32>
    %1 = vector.multi_reduction <add>, %0, %cst [1] : vector<176x196xf32> to vector<176xf32>
    %2 = vector.shape_cast %1 : vector<176xf32> to vector<176x1xf32>
    %cst_1 = arith.constant 0.00510204071 : f32
    %3 = vector.broadcast %cst_1 : f32 to vector<176x1xf32>
    %4 = arith.mulf %2, %3 : vector<176x1xf32>
    %5 = vector.broadcast %4 : vector<176x1xf32> to vector<176x196xf32>
    %6 = arith.subf %0, %5 : vector<176x196xf32>
    %7 = arith.mulf %6, %6 : vector<176x196xf32>
    %cst_2 = arith.constant dense<0.000000e+00> : vector<176xf32>
    %8 = vector.multi_reduction <add>, %7, %cst_2 [1] : vector<176x196xf32> to vector<176xf32>
    %9 = vector.shape_cast %8 : vector<176xf32> to vector<176x1xf32>
    %cst_3 = arith.constant 0.00510204071 : f32
    %10 = vector.broadcast %cst_3 : f32 to vector<176x1xf32>
    %11 = arith.mulf %9, %10 : vector<176x1xf32>
    %c0_4 = arith.constant 0 : index
    %c0_5 = arith.constant 0 : index
    %12 = vector.load %arg2[%c0_4, %c0_5] : memref<176x1xf32, #tpu.memory_space<vmem>>, vector<176x1xf32>
    %cst_6 = arith.constant 1.000000e-03 : f32
    %13 = vector.broadcast %cst_6 : f32 to vector<176x1xf32>
    %14 = arith.addf %11, %13 : vector<176x1xf32>
    %15 = math.rsqrt %14 : vector<176x1xf32>
    %16 = arith.mulf %12, %15 : vector<176x1xf32>
    %c0_7 = arith.constant 0 : index
    %c0_8 = arith.constant 0 : index
    %17 = vector.load %arg3[%c0_7, %c0_8] : memref<176x1xf32, #tpu.memory_space<vmem>>, vector<176x1xf32>
    %18 = vector.broadcast %16 : vector<176x1xf32> to vector<176x196xf32>
    %19 = arith.mulf %6, %18 : vector<176x196xf32>
    %20 = vector.broadcast %17 : vector<176x1xf32> to vector<176x196xf32>
    %21 = arith.addf %19, %20 : vector<176x196xf32>
    %c0_9 = arith.constant 0 : index
    %c0_10 = arith.constant 0 : index
    %22 = vector.load %arg4[%c0_9, %c0_10] : memref<176x196xf32, #tpu.memory_space<vmem>>, vector<176x196xf32>
    tpu.vector_store %arg4[%c0_9, %c0_10], %21 {strides = array<i32>} : memref<176x196xf32, #tpu.memory_space<vmem>>, vector<176x196xf32>,
    return
  }
  func.func @transform_0(%arg0: i32) -> (i32, i32) {
    %c0_i32 = arith.constant 0 : i32
    %c0_i32_0 = arith.constant 0 : i32
    return %arg0, %c0_i32 : i32, i32
  }
  func.func @transform_1(%arg0: i32) -> (i32, i32) {
    %c0_i32 = arith.constant 0 : i32
    %c0_i32_0 = arith.constant 0 : i32
    return %arg0, %c0_i32 : i32, i32
  }
  func.func @transform_2(%arg0: i32) -> (i32, i32) {
    %c0_i32 = arith.constant 0 : i32
    %c0_i32_0 = arith.constant 0 : i32
    return %arg0, %c0_i32 : i32, i32
  }
  func.func @transform_3(%arg0: i32) -> (i32, i32) {
    %c0_i32 = arith.constant 0 : i32
    %c0_i32_0 = arith.constant 0 : i32
    return %arg0, %c0_i32 : i32, i32
  }
}

</mosaic_0001>

<llo_original>
// kernel: tpu_custom_call.1
$region0: #{tpu_custom_call.1}
  #allocation0 [shape = 'u32[]', space=smem, size = 0x4, offset = 0x4, fixed_abs, tag = 'smem constant byte address 0x4 - core index']
  #allocation1 [shape = 'u32[144,128]{1,0:T(1,128)}', space=vmem, size = 0x12000, scoped, tag = 'internal scratch']
  %s0 = inlined_call_operand.vmem [shape: f32[176,196], index: 0, kind: input, shape index: {}]
  %s1 = inlined_call_operand.vmem [shape: f32[176,1], index: 1, kind: input, shape index: {}]
  %s2 = inlined_call_operand.vmem [shape: f32[176,1], index: 2, kind: input, shape index: {}]
  %s3 = inlined_call_operand.hbm [shape: f32[176,196], index: 3, kind: output, shape index: {}]
  %s4 = sld [smem:[#allocation0]]
  $region22: #{tpu_custom_call.1} parent=0
    _
  %s6 = ssub.s32 1, %s4
  %s7 = scalar_select 0, %s6, %s4
  $region1: #{tpu_custom_call.1} parent=0
    #allocation2 [shape = 'u8[180224]{0}', space=vmem, size = 0x2c000, scoped, tag = 'output window, operand 0, single buffered']
    #allocation3 [shape = 's32[1]{0}', space=sflag, size = 0x4, scoped, tag = 'scoped memory for tpu_custom_call.1']
    %8 = vsyncpa [#allocation3], 0
    // Predicated region
    $region2: #{tpu_custom_call.1} parent=1 // pred_check
      _
    $region3: #{tpu_custom_call.1} parent=1 // pred_check_branch
      %10 = sbr.rel (0) target = $region5
    $region4: #{tpu_custom_call.1} parent=1 // pred_region
      _
    $region5: #{tpu_custom_call.1} parent=1 // pred_fallthru
      _
    // Predicated region
    $region6: #{tpu_custom_call.1} parent=1 // pred_check
      _
    $region7: #{tpu_custom_call.1} parent=1 // pred_check_branch
      %12 = sbr.rel (0) target = $region9
    $region8: #{tpu_custom_call.1} parent=1 // pred_region
      _
    $region9: #{tpu_custom_call.1} parent=1 // pred_fallthru
      _
    // Predicated region
    $region10: #{tpu_custom_call.1} parent=1 // pred_check
      _
    $region11: #{tpu_custom_call.1} parent=1 // pred_check_branch
      %14 = sbr.rel (0) target = $region13
    $region12: #{tpu_custom_call.1} parent=1 // pred_region
      _
    $region13: #{tpu_custom_call.1} parent=1 // pred_fallthru
      _
    %v15 = vld [vmem:[%s0] sm:$0xff]
    %v16 = vld [vmem:[%s0 + $0x8] sm:$0xff]
    %v17 = vld [vmem:[%s0 + $0x10] sm:$0xff]
    %v18 = vld [vmem:[%s0 + $0x18] sm:$0xff]
    %v19 = vld [vmem:[%s0 + $0x20] sm:$0xff]
    %v20 = vld [vmem:[%s0 + $0x28] sm:$0xff]
    %v21 = vld [vmem:[%s0 + $0x30] sm:$0xff]
    %v22 = vld [vmem:[%s0 + $0x38] sm:$0xff]
    %v23 = vld [vmem:[%s0 + $0x40] sm:$0xff]
    %v24 = vld [vmem:[%s0 + $0x48] sm:$0xff]
    %v25 = vld [vmem:[%s0 + $0x50] sm:$0xff]
    %v26 = vld [vmem:[%s0 + $0x58] sm:$0xff]
    %v27 = vld [vmem:[%s0 + $0x60] sm:$0xff]
    %v28 = vld [vmem:[%s0 + $0x68] sm:$0xff]
    %v29 = vld [vmem:[%s0 + $0x70] sm:$0xff]
    %v30 = vld [vmem:[%s0 + $0x78] sm:$0xff]
    %v31 = vld [vmem:[%s0 + $0x80] sm:$0xff]
    %v32 = vld [vmem:[%s0 + $0x88] sm:$0xff]
    %v33 = vld [vmem:[%s0 + $0x90] sm:$0xff]
    %v34 = vld [vmem:[%s0 + $0x98] sm:$0xff]
    %v35 = vld [vmem:[%s0 + $0xa0] sm:$0xff]
    %v36 = vld [vmem:[%s0 + $0xa8] sm:$0xff]
    %v37 = vld [vmem:[%s0 + $0xb0] sm:$0xff]
    %v38 = vld [vmem:[%s0 + $0xb8] sm:$0xff]
    %v39 = vld [vmem:[%s0 + $0xc0] sm:$0xff]
    %v40 = vld [vmem:[%s0 + $0xc8] sm:$0xff]
    %v41 = vld [vmem:[%s0 + $0xd0] sm:$0xff]
    %v42 = vld [vmem:[%s0 + $0xd8] sm:$0xff]
    %v43 = vld [vmem:[%s0 + $0xe0] sm:$0xff]
    %v44 = vld [vmem:[%s0 + $0xe8] sm:$0xff]
    %v45 = vld [vmem:[%s0 + $0xf0] sm:$0xff]
    %v46 = vld [vmem:[%s0 + $0xf8] sm:$0xff]
    %v47 = vld [vmem:[%s0 + $0x100] sm:$0xff]
    %v48 = vld [vmem:[%s0 + $0x108] sm:$0xff]
    %v49 = vld [vmem:[%s0 + $0x110] sm:$0xff]
    %v50 = vld [vmem:[%s0 + $0x118] sm:$0xff]
    %v51 = vld [vmem:[%s0 + $0x120] sm:$0xff]
    %v52 = vld [vmem:[%s0 + $0x128] sm:$0xff]
    %v53 = vld [vmem:[%s0 + $0x130] sm:$0xff]
    %v54 = vld [vmem:[%s0 + $0x138] sm:$0xff]
    %v55 = vld [vmem:[%s0 + $0x140] sm:$0xff]
    %v56 = vld [vmem:[%s0 + $0x148] sm:$0xff]
    %v57 = vld [vmem:[%s0 + $0x150] sm:$0xff]
    %v58 = vld [vmem:[%s0 + $0x158] sm:$0xff]
    %vm59 = vcmask 556032
    %v60 = vsel %vm59, %v16, 0.0
    %v61 = vadd.f32 %v15, %v60
    %62 = vadd.xlane.f32.xlu0 %v61
    %v63 = vpop.xlane.xlu0 %62
    %v64 = vsel %vm59, %v18, 0.0
    %v65 = vadd.f32 %v17, %v64
    %66 = vadd.xlane.f32.xlu0 %v65
    %v67 = vpop.xlane.xlu0 %66
    %v68 = vsel %vm59, %v20, 0.0
    %v69 = vadd.f32 %v19, %v68
    %70 = vadd.xlane.f32.xlu0 %v69
    %v71 = vpop.xlane.xlu0 %70
    %v72 = vsel %vm59, %v22, 0.0
    %v73 = vadd.f32 %v21, %v72
    %74 = vadd.xlane.f32.xlu0 %v73
    %v75 = vpop.xlane.xlu0 %74
    %v76 = vsel %vm59, %v24, 0.0
    %v77 = vadd.f32 %v23, %v76
    %78 = vadd.xlane.f32.xlu0 %v77
    %v79 = vpop.xlane.xlu0 %78
    %v80 = vsel %vm59, %v26, 0.0
    %v81 = vadd.f32 %v25, %v80
    %82 = vadd.xlane.f32.xlu0 %v81
    %v83 = vpop.xlane.xlu0 %82
    %v84 = vsel %vm59, %v28, 0.0
    %v85 = vadd.f32 %v27, %v84
    %86 = vadd.xlane.f32.xlu0 %v85
    %v87 = vpop.xlane.xlu0 %86
    %v88 = vsel %vm59, %v30, 0.0
    %v89 = vadd.f32 %v29, %v88
    %90 = vadd.xlane.f32.xlu0 %v89
    %v91 = vpop.xlane.xlu0 %90
    %v92 = vsel %vm59, %v32, 0.0
    %v93 = vadd.f32 %v31, %v92
    %94 = vadd.xlane.f32.xlu0 %v93
    %v95 = vpop.xlane.xlu0 %94
    %v96 = vsel %vm59, %v34, 0.0
    %v97 = vadd.f32 %v33, %v96
    %98 = vadd.xlane.f32.xlu0 %v97
    %v99 = vpop.xlane.xlu0 %98
    %v100 = vsel %vm59, %v36, 0.0
    %v101 = vadd.f32 %v35, %v100
    %102 = vadd.xlane.f32.xlu0 %v101
    %v103 = vpop.xlane.xlu0 %102
    %v104 = vsel %vm59, %v38, 0.0
    %v105 = vadd.f32 %v37, %v104
    %106 = vadd.xlane.f32.xlu0 %v105
    %v107 = vpop.xlane.xlu0 %106
    %v108 = vsel %vm59, %v40, 0.0
    %v109 = vadd.f32 %v39, %v108
    %110 = vadd.xlane.f32.xlu0 %v109
    %v111 = vpop.xlane.xlu0 %110
    %v112 = vsel %vm59, %v42, 0.0
    %v113 = vadd.f32 %v41, %v112
    %114 = vadd.xlane.f32.xlu0 %v113
    %v115 = vpop.xlane.xlu0 %114
    %v116 = vsel %vm59, %v44, 0.0
    %v117 = vadd.f32 %v43, %v116
    %118 = vadd.xlane.f32.xlu0 %v117
    %v119 = vpop.xlane.xlu0 %118
    %v120 = vsel %vm59, %v46, 0.0
    %v121 = vadd.f32 %v45, %v120
    %122 = vadd.xlane.f32.xlu0 %v121
    %v123 = vpop.xlane.xlu0 %122
    %v124 = vsel %vm59, %v48, 0.0
    %v125 = vadd.f32 %v47, %v124
    %126 = vadd.xlane.f32.xlu0 %v125
    %v127 = vpop.xlane.xlu0 %126
    %v128 = vsel %vm59, %v50, 0.0
    %v129 = vadd.f32 %v49, %v128
    %130 = vadd.xlane.f32.xlu0 %v129
    %v131 = vpop.xlane.xlu0 %130
    %v132 = vsel %vm59, %v52, 0.0
    %v133 = vadd.f32 %v51, %v132
    %134 = vadd.xlane.f32.xlu0 %v133
    %v135 = vpop.xlane.xlu0 %134
    %v136 = vsel %vm59, %v54, 0.0
    %v137 = vadd.f32 %v53, %v136
    %138 = vadd.xlane.f32.xlu0 %v137
    %v139 = vpop.xlane.xlu0 %138
    %v140 = vsel %vm59, %v56, 0.0
    %v141 = vadd.f32 %v55, %v140
    %142 = vadd.xlane.f32.xlu0 %v141
    %v143 = vpop.xlane.xlu0 %142
    %v144 = vsel %vm59, %v58, 0.0
    %v145 = vadd.f32 %v57, %v144
    %146 = vadd.xlane.f32.xlu0 %v145
    %v147 = vpop.xlane.xlu0 %146
    %v148 = vmul.f32 %v63, 0.0051020407
    %v149 = vmul.f32 %v67, 0.0051020407
    %v150 = vmul.f32 %v71, 0.0051020407
    %v151 = vmul.f32 %v75, 0.0051020407
    %v152 = vmul.f32 %v79, 0.0051020407
    %v153 = vmul.f32 %v83, 0.0051020407
    %v154 = vmul.f32 %v87, 0.0051020407
    %v155 = vmul.f32 %v91, 0.0051020407
    %v156 = vmul.f32 %v95, 0.0051020407
    %v157 = vmul.f32 %v99, 0.0051020407
    %v158 = vmul.f32 %v103, 0.0051020407
    %v159 = vmul.f32 %v107, 0.0051020407
    %v160 = vmul.f32 %v111, 0.0051020407
    %v161 = vmul.f32 %v115, 0.0051020407
    %v162 = vmul.f32 %v119, 0.0051020407
    %v163 = vmul.f32 %v123, 0.0051020407
    %v164 = vmul.f32 %v127, 0.0051020407
    %v165 = vmul.f32 %v131, 0.0051020407
    %v166 = vmul.f32 %v135, 0.0051020407
    %v167 = vmul.f32 %v139, 0.0051020407
    %v168 = vmul.f32 %v143, 0.0051020407
    %v169 = vmul.f32 %v147, 0.0051020407
    %v170 = vsub.f32 %v15, %v148
    %v171 = vsub.f32 %v16, %v148
    %v172 = vsub.f32 %v17, %v149
    %v173 = vsub.f32 %v18, %v149
    %v174 = vsub.f32 %v19, %v150
    %v175 = vsub.f32 %v20, %v150
    %v176 = vsub.f32 %v21, %v151
    %v177 = vsub.f32 %v22, %v151
    %v178 = vsub.f32 %v23, %v152
    %v179 = vsub.f32 %v24, %v152
    %v180 = vsub.f32 %v25, %v153
    %v181 = vsub.f32 %v26, %v153
    %v182 = vsub.f32 %v27, %v154
    %v183 = vsub.f32 %v28, %v154
    %v184 = vsub.f32 %v29, %v155
    %v185 = vsub.f32 %v30, %v155
    %v186 = vsub.f32 %v31, %v156
    %v187 = vsub.f32 %v32, %v156
    %v188 = vsub.f32 %v33, %v157
    %v189 = vsub.f32 %v34, %v157
    %v190 = vsub.f32 %v35, %v158
    %v191 = vsub.f32 %v36, %v158
    %v192 = vsub.f32 %v37, %v159
    %v193 = vsub.f32 %v38, %v159
    %v194 = vsub.f32 %v39, %v160
    %v195 = vsub.f32 %v40, %v160
    %v196 = vsub.f32 %v41, %v161
    %v197 = vsub.f32 %v42, %v161
    %v198 = vsub.f32 %v43, %v162
    %v199 = vsub.f32 %v44, %v162
    %v200 = vsub.f32 %v45, %v163
    %v201 = vsub.f32 %v46, %v163
    %v202 = vsub.f32 %v47, %v164
    %v203 = vsub.f32 %v48, %v164
    %v204 = vsub.f32 %v49, %v165
    %v205 = vsub.f32 %v50, %v165
    %v206 = vsub.f32 %v51, %v166
    %v207 = vsub.f32 %v52, %v166
    %v208 = vsub.f32 %v53, %v167
    %v209 = vsub.f32 %v54, %v167
    %v210 = vsub.f32 %v55, %v168
    %v211 = vsub.f32 %v56, %v168
    %v212 = vsub.f32 %v57, %v169
    %v213 = vsub.f32 %v58, %v169
    %v214 = vmul.f32 %v170, %v170
    %v215 = vmul.f32 %v171, %v171
    %v216 = vmul.f32 %v172, %v172
    %v217 = vmul.f32 %v173, %v173
    %v218 = vmul.f32 %v174, %v174
    %v219 = vmul.f32 %v175, %v175
    %v220 = vmul.f32 %v176, %v176
    %v221 = vmul.f32 %v177, %v177
    %v222 = vmul.f32 %v178, %v178
    %v223 = vmul.f32 %v179, %v179
    %v224 = vmul.f32 %v180, %v180
    %v225 = vmul.f32 %v181, %v181
    %v226 = vmul.f32 %v182, %v182
    %v227 = vmul.f32 %v183, %v183
    %v228 = vmul.f32 %v184, %v184
    %v229 = vmul.f32 %v185, %v185
    %v230 = vmul.f32 %v186, %v186
    %v231 = vmul.f32 %v187, %v187
    %v232 = vmul.f32 %v188, %v188
    %v233 = vmul.f32 %v189, %v189
    %v234 = vmul.f32 %v190, %v190
    %v235 = vmul.f32 %v191, %v191
    %v236 = vmul.f32 %v192, %v192
    %v237 = vmul.f32 %v193, %v193
    %v238 = vmul.f32 %v194, %v194
    %v239 = vmul.f32 %v195, %v195
    %v240 = vmul.f32 %v196, %v196
    %v241 = vmul.f32 %v197, %v197
    %v242 = vmul.f32 %v198, %v198
    %v243 = vmul.f32 %v199, %v199
    %v244 = vmul.f32 %v200, %v200
    %v245 = vmul.f32 %v201, %v201
    %v246 = vmul.f32 %v202, %v202
    %v247 = vmul.f32 %v203, %v203
    %v248 = vmul.f32 %v204, %v204
    %v249 = vmul.f32 %v205, %v205
    %v250 = vmul.f32 %v206, %v206
    %v251 = vmul.f32 %v207, %v207
    %v252 = vmul.f32 %v208, %v208
    %v253 = vmul.f32 %v209, %v209
    %v254 = vmul.f32 %v210, %v210
    %v255 = vmul.f32 %v211, %v211
    %v256 = vmul.f32 %v212, %v212
    %v257 = vmul.f32 %v213, %v213
    %v258 = vsel %vm59, %v215, 0.0
    %v259 = vadd.f32 %v214, %v258
    %260 = vadd.xlane.f32.xlu0 %v259
    %v261 = vpop.xlane.xlu0 %260
    %v262 = vsel %vm59, %v217, 0.0
    %v263 = vadd.f32 %v216, %v262
    %264 = vadd.xlane.f32.xlu0 %v263
    %v265 = vpop.xlane.xlu0 %264
    %v266 = vsel %vm59, %v219, 0.0
    %v267 = vadd.f32 %v218, %v266
    %268 = vadd.xlane.f32.xlu0 %v267
    %v269 = vpop.xlane.xlu0 %268
    %v270 = vsel %vm59, %v221, 0.0
    %v271 = vadd.f32 %v220, %v270
    %272 = vadd.xlane.f32.xlu0 %v271
    %v273 = vpop.xlane.xlu0 %272
    %v274 = vsel %vm59, %v223, 0.0
    %v275 = vadd.f32 %v222, %v274
    %276 = vadd.xlane.f32.xlu0 %v275
    %v277 = vpop.xlane.xlu0 %276
    %v278 = vsel %vm59, %v225, 0.0
    %v279 = vadd.f32 %v224, %v278
    %280 = vadd.xlane.f32.xlu0 %v279
    %v281 = vpop.xlane.xlu0 %280
    %v282 = vsel %vm59, %v227, 0.0
    %v283 = vadd.f32 %v226, %v282
    %284 = vadd.xlane.f32.xlu0 %v283
    %v285 = vpop.xlane.xlu0 %284
    %v286 = vsel %vm59, %v229, 0.0
    %v287 = vadd.f32 %v228, %v286
    %288 = vadd.xlane.f32.xlu0 %v287
    %v289 = vpop.xlane.xlu0 %288
    %v290 = vsel %vm59, %v231, 0.0
    %v291 = vadd.f32 %v230, %v290
    %292 = vadd.xlane.f32.xlu0 %v291
    %v293 = vpop.xlane.xlu0 %292
    %v294 = vsel %vm59, %v233, 0.0
    %v295 = vadd.f32 %v232, %v294
    %296 = vadd.xlane.f32.xlu0 %v295
    %v297 = vpop.xlane.xlu0 %296
    %v298 = vsel %vm59, %v235, 0.0
    %v299 = vadd.f32 %v234, %v298
    %300 = vadd.xlane.f32.xlu0 %v299
    %v301 = vpop.xlane.xlu0 %300
    %v302 = vsel %vm59, %v237, 0.0
    %v303 = vadd.f32 %v236, %v302
    %304 = vadd.xlane.f32.xlu0 %v303
    %v305 = vpop.xlane.xlu0 %304
    %v306 = vsel %vm59, %v239, 0.0
    %v307 = vadd.f32 %v238, %v306
    %308 = vadd.xlane.f32.xlu0 %v307
    %v309 = vpop.xlane.xlu0 %308
    %v310 = vsel %vm59, %v241, 0.0
    %v311 = vadd.f32 %v240, %v310
    %312 = vadd.xlane.f32.xlu0 %v311
    %v313 = vpop.xlane.xlu0 %312
    %v314 = vsel %vm59, %v243, 0.0
    %v315 = vadd.f32 %v242, %v314
    %316 = vadd.xlane.f32.xlu0 %v315
    %v317 = vpop.xlane.xlu0 %316
    %v318 = vsel %vm59, %v245, 0.0
    %v319 = vadd.f32 %v244, %v318
    %320 = vadd.xlane.f32.xlu0 %v319
    %v321 = vpop.xlane.xlu0 %320
    %v322 = vsel %vm59, %v247, 0.0
    %v323 = vadd.f32 %v246, %v322
    %324 = vadd.xlane.f32.xlu0 %v323
    %v325 = vpop.xlane.xlu0 %324
    %v326 = vsel %vm59, %v249, 0.0
    %v327 = vadd.f32 %v248, %v326
    %328 = vadd.xlane.f32.xlu0 %v327
    %v329 = vpop.xlane.xlu0 %328
    %v330 = vsel %vm59, %v251, 0.0
    %v331 = vadd.f32 %v250, %v330
    %332 = vadd.xlane.f32.xlu0 %v331
    %v333 = vpop.xlane.xlu0 %332
    %v334 = vsel %vm59, %v253, 0.0
    %v335 = vadd.f32 %v252, %v334
    %336 = vadd.xlane.f32.xlu0 %v335
    %v337 = vpop.xlane.xlu0 %336
    %v338 = vsel %vm59, %v255, 0.0
    %v339 = vadd.f32 %v254, %v338
    %340 = vadd.xlane.f32.xlu0 %v339
    %v341 = vpop.xlane.xlu0 %340
    %v342 = vsel %vm59, %v257, 0.0
    %v343 = vadd.f32 %v256, %v342
    %344 = vadd.xlane.f32.xlu0 %v343
    %v345 = vpop.xlane.xlu0 %344
    %v346 = vmul.f32 %v261, 0.0051020407
    %v347 = vmul.f32 %v265, 0.0051020407
    %v348 = vmul.f32 %v269, 0.0051020407
    %v349 = vmul.f32 %v273, 0.0051020407
    %v350 = vmul.f32 %v277, 0.0051020407
    %v351 = vmul.f32 %v281, 0.0051020407
    %v352 = vmul.f32 %v285, 0.0051020407
    %v353 = vmul.f32 %v289, 0.0051020407
    %v354 = vmul.f32 %v293, 0.0051020407
    %v355 = vmul.f32 %v297, 0.0051020407
    %v356 = vmul.f32 %v301, 0.0051020407
    %v357 = vmul.f32 %v305, 0.0051020407
    %v358 = vmul.f32 %v309, 0.0051020407
    %v359 = vmul.f32 %v313, 0.0051020407
    %v360 = vmul.f32 %v317, 0.0051020407
    %v361 = vmul.f32 %v321, 0.0051020407
    %v362 = vmul.f32 %v325, 0.0051020407
    %v363 = vmul.f32 %v329, 0.0051020407
    %v364 = vmul.f32 %v333, 0.0051020407
    %v365 = vmul.f32 %v337, 0.0051020407
    %v366 = vmul.f32 %v341, 0.0051020407
    %v367 = vmul.f32 %v345, 0.0051020407
    %v368 = vld [vmem:[%s1] sm:$0xff]
    %v369 = vld [vmem:[%s1 + $0x8] sm:$0xff]
    %v370 = vld [vmem:[%s1 + $0x10] sm:$0xff]
    %v371 = vld [vmem:[%s1 + $0x18] sm:$0xff]
    %v372 = vld [vmem:[%s1 + $0x20] sm:$0xff]
    %v373 = vld [vmem:[%s1 + $0x28] sm:$0xff]
    %v374 = vld [vmem:[%s1 + $0x30] sm:$0xff]
    %v375 = vld [vmem:[%s1 + $0x38] sm:$0xff]
    %v376 = vld [vmem:[%s1 + $0x40] sm:$0xff]
    %v377 = vld [vmem:[%s1 + $0x48] sm:$0xff]
    %v378 = vld [vmem:[%s1 + $0x50] sm:$0xff]
    %v379 = vld [vmem:[%s1 + $0x58] sm:$0xff]
    %v380 = vld [vmem:[%s1 + $0x60] sm:$0xff]
    %v381 = vld [vmem:[%s1 + $0x68] sm:$0xff]
    %v382 = vld [vmem:[%s1 + $0x70] sm:$0xff]
    %v383 = vld [vmem:[%s1 + $0x78] sm:$0xff]
    %v384 = vld [vmem:[%s1 + $0x80] sm:$0xff]
    %v385 = vld [vmem:[%s1 + $0x88] sm:$0xff]
    %v386 = vld [vmem:[%s1 + $0x90] sm:$0xff]
    %v387 = vld [vmem:[%s1 + $0x98] sm:$0xff]
    %v388 = vld [vmem:[%s1 + $0xa0] sm:$0xff]
    %v389 = vld [vmem:[%s1 + $0xa8] sm:$0xff]
    %v390 = vadd.f32 %v346, 0.001
    %v391 = vadd.f32 %v347, 0.001
    %v392 = vadd.f32 %v348, 0.001
    %v393 = vadd.f32 %v349, 0.001
    %v394 = vadd.f32 %v350, 0.001
    %v395 = vadd.f32 %v351, 0.001
    %v396 = vadd.f32 %v352, 0.001
    %v397 = vadd.f32 %v353, 0.001
    %v398 = vadd.f32 %v354, 0.001
    %v399 = vadd.f32 %v355, 0.001
    %v400 = vadd.f32 %v356, 0.001
    %v401 = vadd.f32 %v357, 0.001
    %v402 = vadd.f32 %v358, 0.001
    %v403 = vadd.f32 %v359, 0.001
    %v404 = vadd.f32 %v360, 0.001
    %v405 = vadd.f32 %v361, 0.001
    %v406 = vadd.f32 %v362, 0.001
    %v407 = vadd.f32 %v363, 0.001
    %v408 = vadd.f32 %v364, 0.001
    %v409 = vadd.f32 %v365, 0.001
    %v410 = vadd.f32 %v366, 0.001
    %v411 = vadd.f32 %v367, 0.001
    %v412 = vrsqrt.pop %v390
    %v413 = vrsqrt.pop %v391
    %v414 = vrsqrt.pop %v392
    %v415 = vrsqrt.pop %v393
    %v416 = vrsqrt.pop %v394
    %v417 = vrsqrt.pop %v395
    %v418 = vrsqrt.pop %v396
    %v419 = vrsqrt.pop %v397
    %v420 = vrsqrt.pop %v398
    %v421 = vrsqrt.pop %v399
    %v422 = vrsqrt.pop %v400
    %v423 = vrsqrt.pop %v401
    %v424 = vrsqrt.pop %v402
    %v425 = vrsqrt.pop %v403
    %v426 = vrsqrt.pop %v404
    %v427 = vrsqrt.pop %v405
    %v428 = vrsqrt.pop %v406
    %v429 = vrsqrt.pop %v407
    %v430 = vrsqrt.pop %v408
    %v431 = vrsqrt.pop %v409
    %v432 = vrsqrt.pop %v410
    %v433 = vrsqrt.pop %v411
    %v434 = vmul.f32 %v368, %v412
    %v435 = vmul.f32 %v369, %v413
    %v436 = vmul.f32 %v370, %v414
    %v437 = vmul.f32 %v371, %v415
    %v438 = vmul.f32 %v372, %v416
    %v439 = vmul.f32 %v373, %v417
    %v440 = vmul.f32 %v374, %v418
    %v441 = vmul.f32 %v375, %v419
    %v442 = vmul.f32 %v376, %v420
    %v443 = vmul.f32 %v377, %v421
    %v444 = vmul.f32 %v378, %v422
    %v445 = vmul.f32 %v379, %v423
    %v446 = vmul.f32 %v380, %v424
    %v447 = vmul.f32 %v381, %v425
    %v448 = vmul.f32 %v382, %v426
    %v449 = vmul.f32 %v383, %v427
    %v450 = vmul.f32 %v384, %v428
    %v451 = vmul.f32 %v385, %v429
    %v452 = vmul.f32 %v386, %v430
    %v453 = vmul.f32 %v387, %v431
    %v454 = vmul.f32 %v388, %v432
    %v455 = vmul.f32 %v389, %v433
    %v456 = vld [vmem:[%s2] sm:$0xff]
    %v457 = vld [vmem:[%s2 + $0x8] sm:$0xff]
    %v458 = vld [vmem:[%s2 + $0x10] sm:$0xff]
    %v459 = vld [vmem:[%s2 + $0x18] sm:$0xff]
    %v460 = vld [vmem:[%s2 + $0x20] sm:$0xff]
    %v461 = vld [vmem:[%s2 + $0x28] sm:$0xff]
    %v462 = vld [vmem:[%s2 + $0x30] sm:$0xff]
    %v463 = vld [vmem:[%s2 + $0x38] sm:$0xff]
    %v464 = vld [vmem:[%s2 + $0x40] sm:$0xff]
    %v465 = vld [vmem:[%s2 + $0x48] sm:$0xff]
    %v466 = vld [vmem:[%s2 + $0x50] sm:$0xff]
    %v467 = vld [vmem:[%s2 + $0x58] sm:$0xff]
    %v468 = vld [vmem:[%s2 + $0x60] sm:$0xff]
    %v469 = vld [vmem:[%s2 + $0x68] sm:$0xff]
    %v470 = vld [vmem:[%s2 + $0x70] sm:$0xff]
    %v471 = vld [vmem:[%s2 + $0x78] sm:$0xff]
    %v472 = vld [vmem:[%s2 + $0x80] sm:$0xff]
    %v473 = vld [vmem:[%s2 + $0x88] sm:$0xff]
    %v474 = vld [vmem:[%s2 + $0x90] sm:$0xff]
    %v475 = vld [vmem:[%s2 + $0x98] sm:$0xff]
    %v476 = vld [vmem:[%s2 + $0xa0] sm:$0xff]
    %v477 = vld [vmem:[%s2 + $0xa8] sm:$0xff]
    %479 = vset.pattern.permute.xlu0 0
    %480 = vperm.xlu0 %479, %v434
    %v481 = vpop.permute.xlu0 %480
    %484 = vset.pattern.permute.xlu0 0
    %485 = vperm.xlu0 %484, %v435
    %v486 = vpop.permute.xlu0 %485
    %489 = vset.pattern.permute.xlu0 0
    %490 = vperm.xlu0 %489, %v436
    %v491 = vpop.permute.xlu0 %490
    %494 = vset.pattern.permute.xlu0 0
    %495 = vperm.xlu0 %494, %v437
    %v496 = vpop.permute.xlu0 %495
    %499 = vset.pattern.permute.xlu0 0
    %500 = vperm.xlu0 %499, %v438
    %v501 = vpop.permute.xlu0 %500
    %504 = vset.pattern.permute.xlu0 0
    %505 = vperm.xlu0 %504, %v439
    %v506 = vpop.permute.xlu0 %505
    %509 = vset.pattern.permute.xlu0 0
    %510 = vperm.xlu0 %509, %v440
    %v511 = vpop.permute.xlu0 %510
    %514 = vset.pattern.permute.xlu0 0
    %515 = vperm.xlu0 %514, %v441
    %v516 = vpop.permute.xlu0 %515
    %519 = vset.pattern.permute.xlu0 0
    %520 = vperm.xlu0 %519, %v442
    %v521 = vpop.permute.xlu0 %520
    %524 = vset.pattern.permute.xlu0 0
    %525 = vperm.xlu0 %524, %v443
    %v526 = vpop.permute.xlu0 %525
    %529 = vset.pattern.permute.xlu0 0
    %530 = vperm.xlu0 %529, %v444
    %v531 = vpop.permute.xlu0 %530
    %534 = vset.pattern.permute.xlu0 0
    %535 = vperm.xlu0 %534, %v445
    %v536 = vpop.permute.xlu0 %535
    %539 = vset.pattern.permute.xlu0 0
    %540 = vperm.xlu0 %539, %v446
    %v541 = vpop.permute.xlu0 %540
    %544 = vset.pattern.permute.xlu0 0
    %545 = vperm.xlu0 %544, %v447
    %v546 = vpop.permute.xlu0 %545
    %549 = vset.pattern.permute.xlu0 0
    %550 = vperm.xlu0 %549, %v448
    %v551 = vpop.permute.xlu0 %550
    %554 = vset.pattern.permute.xlu0 0
    %555 = vperm.xlu0 %554, %v449
    %v556 = vpop.permute.xlu0 %555
    %559 = vset.pattern.permute.xlu0 0
    %560 = vperm.xlu0 %559, %v450
    %v561 = vpop.permute.xlu0 %560
    %564 = vset.pattern.permute.xlu0 0
    %565 = vperm.xlu0 %564, %v451
    %v566 = vpop.permute.xlu0 %565
    %569 = vset.pattern.permute.xlu0 0
    %570 = vperm.xlu0 %569, %v452
    %v571 = vpop.permute.xlu0 %570
    %574 = vset.pattern.permute.xlu0 0
    %575 = vperm.xlu0 %574, %v453
    %v576 = vpop.permute.xlu0 %575
    %579 = vset.pattern.permute.xlu0 0
    %580 = vperm.xlu0 %579, %v454
    %v581 = vpop.permute.xlu0 %580
    %584 = vset.pattern.permute.xlu0 0
    %585 = vperm.xlu0 %584, %v455
    %v586 = vpop.permute.xlu0 %585
    %v588 = vmul.f32 %v170, %v481
    %v589 = vmul.f32 %v171, %v481
    %v590 = vmul.f32 %v172, %v486
    %v591 = vmul.f32 %v173, %v486
    %v592 = vmul.f32 %v174, %v491
    %v593 = vmul.f32 %v175, %v491
    %v594 = vmul.f32 %v176, %v496
    %v595 = vmul.f32 %v177, %v496
    %v596 = vmul.f32 %v178, %v501
    %v597 = vmul.f32 %v179, %v501
    %v598 = vmul.f32 %v180, %v506
    %v599 = vmul.f32 %v181, %v506
    %v600 = vmul.f32 %v182, %v511
    %v601 = vmul.f32 %v183, %v511
    %v602 = vmul.f32 %v184, %v516
    %v603 = vmul.f32 %v185, %v516
    %v604 = vmul.f32 %v186, %v521
    %v605 = vmul.f32 %v187, %v521
    %v606 = vmul.f32 %v188, %v526
    %v607 = vmul.f32 %v189, %v526
    %v608 = vmul.f32 %v190, %v531
    %v609 = vmul.f32 %v191, %v531
    %v610 = vmul.f32 %v192, %v536
    %v611 = vmul.f32 %v193, %v536
    %v612 = vmul.f32 %v194, %v541
    %v613 = vmul.f32 %v195, %v541
    %v614 = vmul.f32 %v196, %v546
    %v615 = vmul.f32 %v197, %v546
    %v616 = vmul.f32 %v198, %v551
    %v617 = vmul.f32 %v199, %v551
    %v618 = vmul.f32 %v200, %v556
    %v619 = vmul.f32 %v201, %v556
    %v620 = vmul.f32 %v202, %v561
    %v621 = vmul.f32 %v203, %v561
    %v622 = vmul.f32 %v204, %v566
    %v623 = vmul.f32 %v205, %v566
    %v624 = vmul.f32 %v206, %v571
    %v625 = vmul.f32 %v207, %v571
    %v626 = vmul.f32 %v208, %v576
    %v627 = vmul.f32 %v209, %v576
    %v628 = vmul.f32 %v210, %v581
    %v629 = vmul.f32 %v211, %v581
    %v630 = vmul.f32 %v212, %v586
    %v631 = vmul.f32 %v213, %v586
    %633 = vset.pattern.permute.xlu0 0
    %634 = vperm.xlu0 %633, %v456
    %v635 = vpop.permute.xlu0 %634
    %638 = vset.pattern.permute.xlu0 0
    %639 = vperm.xlu0 %638, %v457
    %v640 = vpop.permute.xlu0 %639
    %643 = vset.pattern.permute.xlu0 0
    %644 = vperm.xlu0 %643, %v458
    %v645 = vpop.permute.xlu0 %644
    %648 = vset.pattern.permute.xlu0 0
    %649 = vperm.xlu0 %648, %v459
    %v650 = vpop.permute.xlu0 %649
    %653 = vset.pattern.permute.xlu0 0
    %654 = vperm.xlu0 %653, %v460
    %v655 = vpop.permute.xlu0 %654
    %658 = vset.pattern.permute.xlu0 0
    %659 = vperm.xlu0 %658, %v461
    %v660 = vpop.permute.xlu0 %659
    %663 = vset.pattern.permute.xlu0 0
    %664 = vperm.xlu0 %663, %v462
    %v665 = vpop.permute.xlu0 %664
    %668 = vset.pattern.permute.xlu0 0
    %669 = vperm.xlu0 %668, %v463
    %v670 = vpop.permute.xlu0 %669
    %673 = vset.pattern.permute.xlu0 0
    %674 = vperm.xlu0 %673, %v464
    %v675 = vpop.permute.xlu0 %674
    %678 = vset.pattern.permute.xlu0 0
    %679 = vperm.xlu0 %678, %v465
    %v680 = vpop.permute.xlu0 %679
    %683 = vset.pattern.permute.xlu0 0
    %684 = vperm.xlu0 %683, %v466
    %v685 = vpop.permute.xlu0 %684
    %688 = vset.pattern.permute.xlu0 0
    %689 = vperm.xlu0 %688, %v467
    %v690 = vpop.permute.xlu0 %689
    %693 = vset.pattern.permute.xlu0 0
    %694 = vperm.xlu0 %693, %v468
    %v695 = vpop.permute.xlu0 %694
    %698 = vset.pattern.permute.xlu0 0
    %699 = vperm.xlu0 %698, %v469
    %v700 = vpop.permute.xlu0 %699
    %703 = vset.pattern.permute.xlu0 0
    %704 = vperm.xlu0 %703, %v470
    %v705 = vpop.permute.xlu0 %704
    %708 = vset.pattern.permute.xlu0 0
    %709 = vperm.xlu0 %708, %v471
    %v710 = vpop.permute.xlu0 %709
    %713 = vset.pattern.permute.xlu0 0
    %714 = vperm.xlu0 %713, %v472
    %v715 = vpop.permute.xlu0 %714
    %718 = vset.pattern.permute.xlu0 0
    %719 = vperm.xlu0 %718, %v473
    %v720 = vpop.permute.xlu0 %719
    %723 = vset.pattern.permute.xlu0 0
    %724 = vperm.xlu0 %723, %v474
    %v725 = vpop.permute.xlu0 %724
    %728 = vset.pattern.permute.xlu0 0
    %729 = vperm.xlu0 %728, %v475
    %v730 = vpop.permute.xlu0 %729
    %733 = vset.pattern.permute.xlu0 0
    %734 = vperm.xlu0 %733, %v476
    %v735 = vpop.permute.xlu0 %734
    %738 = vset.pattern.permute.xlu0 0
    %739 = vperm.xlu0 %738, %v477
    %v740 = vpop.permute.xlu0 %739
    %v742 = vadd.f32 %v588, %v635
    %v743 = vadd.f32 %v589, %v635
    %v744 = vadd.f32 %v590, %v640
    %v745 = vadd.f32 %v591, %v640
    %v746 = vadd.f32 %v592, %v645
    %v747 = vadd.f32 %v593, %v645
    %v748 = vadd.f32 %v594, %v650
    %v749 = vadd.f32 %v595, %v650
    %v750 = vadd.f32 %v596, %v655
    %v751 = vadd.f32 %v597, %v655
    %v752 = vadd.f32 %v598, %v660
    %v753 = vadd.f32 %v599, %v660
    %v754 = vadd.f32 %v600, %v665
    %v755 = vadd.f32 %v601, %v665
    %v756 = vadd.f32 %v602, %v670
    %v757 = vadd.f32 %v603, %v670
    %v758 = vadd.f32 %v604, %v675
    %v759 = vadd.f32 %v605, %v675
    %v760 = vadd.f32 %v606, %v680
    %v761 = vadd.f32 %v607, %v680
    %v762 = vadd.f32 %v608, %v685
    %v763 = vadd.f32 %v609, %v685
    %v764 = vadd.f32 %v610, %v690
    %v765 = vadd.f32 %v611, %v690
    %v766 = vadd.f32 %v612, %v695
    %v767 = vadd.f32 %v613, %v695
    %v768 = vadd.f32 %v614, %v700
    %v769 = vadd.f32 %v615, %v700
    %v770 = vadd.f32 %v616, %v705
    %v771 = vadd.f32 %v617, %v705
    %v772 = vadd.f32 %v618, %v710
    %v773 = vadd.f32 %v619, %v710
    %v774 = vadd.f32 %v620, %v715
    %v775 = vadd.f32 %v621, %v715
    %v776 = vadd.f32 %v622, %v720
    %v777 = vadd.f32 %v623, %v720
    %v778 = vadd.f32 %v624, %v725
    %v779 = vadd.f32 %v625, %v725
    %v780 = vadd.f32 %v626, %v730
    %v781 = vadd.f32 %v627, %v730
    %v782 = vadd.f32 %v628, %v735
    %v783 = vadd.f32 %v629, %v735
    %v784 = vadd.f32 %v630, %v740
    %v785 = vadd.f32 %v631, %v740
    %786 = vst [vmem:[#allocation2] sm:$0xff] %v742
    %787 = vst.msk [vmem:[#allocation2 + $0x8] sm:$0xff] %vm59, %v743
    %788 = vst [vmem:[#allocation2 + $0x10] sm:$0xff] %v744
    %789 = vst.msk [vmem:[#allocation2 + $0x18] sm:$0xff] %vm59, %v745
    %790 = vst [vmem:[#allocation2 + $0x20] sm:$0xff] %v746
    %791 = vst.msk [vmem:[#allocation2 + $0x28] sm:$0xff] %vm59, %v747
    %792 = vst [vmem:[#allocation2 + $0x30] sm:$0xff] %v748
    %793 = vst.msk [vmem:[#allocation2 + $0x38] sm:$0xff] %vm59, %v749
    %794 = vst [vmem:[#allocation2 + $0x40] sm:$0xff] %v750
    %795 = vst.msk [vmem:[#allocation2 + $0x48] sm:$0xff] %vm59, %v751
    %796 = vst [vmem:[#allocation2 + $0x50] sm:$0xff] %v752
    %797 = vst.msk [vmem:[#allocation2 + $0x58] sm:$0xff] %vm59, %v753
    %798 = vst [vmem:[#allocation2 + $0x60] sm:$0xff] %v754
    %799 = vst.msk [vmem:[#allocation2 + $0x68] sm:$0xff] %vm59, %v755
    %800 = vst [vmem:[#allocation2 + $0x70] sm:$0xff] %v756
    %801 = vst.msk [vmem:[#allocation2 + $0x78] sm:$0xff] %vm59, %v757
    %802 = vst [vmem:[#allocation2 + $0x80] sm:$0xff] %v758
    %803 = vst.msk [vmem:[#allocation2 + $0x88] sm:$0xff] %vm59, %v759
    %804 = vst [vmem:[#allocation2 + $0x90] sm:$0xff] %v760
    %805 = vst.msk [vmem:[#allocation2 + $0x98] sm:$0xff] %vm59, %v761
    %806 = vst [vmem:[#allocation2 + $0xa0] sm:$0xff] %v762
    %807 = vst.msk [vmem:[#allocation2 + $0xa8] sm:$0xff] %vm59, %v763
    %808 = vst [vmem:[#allocation2 + $0xb0] sm:$0xff] %v764
    %809 = vst.msk [vmem:[#allocation2 + $0xb8] sm:$0xff] %vm59, %v765
    %810 = vst [vmem:[#allocation2 + $0xc0] sm:$0xff] %v766
    %811 = vst.msk [vmem:[#allocation2 + $0xc8] sm:$0xff] %vm59, %v767
    %812 = vst [vmem:[#allocation2 + $0xd0] sm:$0xff] %v768
    %813 = vst.msk [vmem:[#allocation2 + $0xd8] sm:$0xff] %vm59, %v769
    %814 = vst [vmem:[#allocation2 + $0xe0] sm:$0xff] %v770
    %815 = vst.msk [vmem:[#allocation2 + $0xe8] sm:$0xff] %vm59, %v771
    %816 = vst [vmem:[#allocation2 + $0xf0] sm:$0xff] %v772
    %817 = vst.msk [vmem:[#allocation2 + $0xf8] sm:$0xff] %vm59, %v773
    %818 = vst [vmem:[#allocation2 + $0x100] sm:$0xff] %v774
    %819 = vst.msk [vmem:[#allocation2 + $0x108] sm:$0xff] %vm59, %v775
    %820 = vst [vmem:[#allocation2 + $0x110] sm:$0xff] %v776
    %821 = vst.msk [vmem:[#allocation2 + $0x118] sm:$0xff] %vm59, %v777
    %822 = vst [vmem:[#allocation2 + $0x120] sm:$0xff] %v778
    %823 = vst.msk [vmem:[#allocation2 + $0x128] sm:$0xff] %vm59, %v779
    %824 = vst [vmem:[#allocation2 + $0x130] sm:$0xff] %v780
    %825 = vst.msk [vmem:[#allocation2 + $0x138] sm:$0xff] %vm59, %v781
    %826 = vst [vmem:[#allocation2 + $0x140] sm:$0xff] %v782
    %827 = vst.msk [vmem:[#allocation2 + $0x148] sm:$0xff] %vm59, %v783
    %828 = vst [vmem:[#allocation2 + $0x150] sm:$0xff] %v784
    %829 = vst.msk [vmem:[#allocation2 + $0x158] sm:$0xff] %vm59, %v785
    // Predicated region
    $region14: #{tpu_custom_call.1} parent=1 // pred_check
      _
    $region15: #{tpu_custom_call.1} parent=1 // pred_check_branch
      %831 = sbr.rel (0) target = $region17
    $region16: #{tpu_custom_call.1} parent=1 // pred_region
      %s833 = ssub.s32 5632, 5632
      %834 = vsyncadd [#allocation3], %s833
      %s835 = sshll.u32 [#allocation2], 4
      %s836 = int_to_ptr.vmem [resolvable:$true] %s835
      %841 = dma.vmem_to_hbm [thread:$0]  %s836, 5632, %s3, [#allocation3], 256, 256, 16
    $region17: #{tpu_custom_call.1} parent=1 // pred_fallthru
      _
    // Predicated region
    $region18: #{tpu_custom_call.1} parent=1 // pred_check
      _
    $region19: #{tpu_custom_call.1} parent=1 // pred_check_branch
      %843 = sbr.rel (0) target = $region21
    $region20: #{tpu_custom_call.1} parent=1 // pred_region
      %844 = dma.done [#allocation3], 5632
    $region21: #{tpu_custom_call.1} parent=1 // pred_fallthru
      _
    %845 = vsyncpa [#allocation3], 1

</llo_original>
